<compile_context>
chip_gen: v7x
topology: tpu7x:2x2x1
jax: 0.10.0
libtpu: 0.0.40
codegen_flags: <defaults>
</compile_context>

<pallas_src>
import functools

import jax
import jax.numpy as jnp
from jax.experimental import pallas as pl
from jax.experimental.pallas import tpu as pltpu


def _round_up(n, m):
    return ((n + m - 1) // m) * m


# ----------------------------------------------------------------------------
# Pallas kernel: fused (embedding gather + Linear + SiLU + Linear + SiLU)
# ----------------------------------------------------------------------------
def _diff_embed_kernel(steps_ref,                  # SMEM (Bp,) int32  [scalar prefetch]
                       table_ref,                  # VMEM (S, 2E) f32   (resident)
                       w1_ref, b1_ref,             # VMEM (2E, Hp), (1, Hp)
                       w2_ref, b2_ref,             # VMEM (Hp, Hp), (1, Hp)
                       o_ref,                      # VMEM (TB, Hp) f32
                       x_scratch,                  # VMEM (TB, 2E) f32
                       *, tb):
    i = pl.program_id(0)

    # Fused embedding-row gather: pull this tile's tb rows of the sinusoidal
    # table straight from the VMEM-resident table (no HBM round trip, no extra
    # dispatch).  Short unrolled loop; tb is a small Python constant.
    for j in range(tb):
        step = steps_ref[i * tb + j]
        x_scratch[pl.ds(j, 1), :] = table_ref[pl.ds(step, 1), :]

    x = x_scratch[...]                                              # (TB, 2E)

    h = jnp.dot(x, w1_ref[...], preferred_element_type=jnp.float32)
    h = h + b1_ref[...]                                             # (TB, Hp)
    h = h * jax.nn.sigmoid(h)                                       # SiLU

    y = jnp.dot(h, w2_ref[...], preferred_element_type=jnp.float32)
    y = y + b2_ref[...]
    y = y * jax.nn.sigmoid(y)                                       # SiLU

    o_ref[...] = y.astype(o_ref.dtype)


def diffusion_embedding_forward(diffusion_step, table, params, *, tb=8):
    """diffusion_step: (B,) int; table: (S, 2E) f32; params = (w1, b1, w2, b2)
    with w1:(2E,H), b1:(H,), w2:(H,H), b2:(H,).  Returns (B, H) f32."""
    w1, b1, w2, b2 = params
    S, twoE = table.shape
    H = w1.shape[1]
    B = diffusion_step.shape[0]

    Hp = _round_up(H, 128)          # lane-dense hidden width (unmasked stores)
    Bp = _round_up(B, tb)           # whole number of batch tiles

    # Zero-pad parameters to the lane-dense width.  Exact: SiLU(0) = 0 and the
    # padded rows of W2 are zero, so padded columns never leak into real ones.
    # (In production this padding would be hoisted out of the forward pass.)
    w1p = jnp.zeros((twoE, Hp), jnp.float32).at[:, :H].set(w1)
    b1p = jnp.zeros((1, Hp), jnp.float32).at[:, :H].set(b1.reshape(1, H))
    w2p = jnp.zeros((Hp, Hp), jnp.float32).at[:H, :H].set(w2)
    b2p = jnp.zeros((1, Hp), jnp.float32).at[:, :H].set(b2.reshape(1, H))

    # Pad the step indices to a whole number of tiles (index 0 is always valid;
    # the padded rows are sliced off below).
    steps = jnp.zeros((Bp,), jnp.int32).at[:B].set(
        diffusion_step.astype(jnp.int32))

    const = lambda shape: pl.BlockSpec(shape, lambda i, steps: (0, 0))

    out = pl.pallas_call(
        functools.partial(_diff_embed_kernel, tb=tb),
        out_shape=jax.ShapeDtypeStruct((Bp, Hp), jnp.float32),
        grid_spec=pltpu.PrefetchScalarGridSpec(
            num_scalar_prefetch=1,          # diffusion_step -> SMEM
            grid=(Bp // tb,),
            in_specs=[
                const((S, twoE)),           # sinusoidal table, VMEM resident
                const((twoE, Hp)),          # W1
                const((1, Hp)),             # b1
                const((Hp, Hp)),            # W2
                const((1, Hp)),             # b2
            ],
            out_specs=pl.BlockSpec((tb, Hp), lambda i, steps: (i, 0)),
            scratch_shapes=[pltpu.VMEM((tb, twoE), jnp.float32)],
        ),
        compiler_params=pltpu.CompilerParams(
            dimension_semantics=("parallel",)),  # v7x: split batch tiles over TCs
    )(steps, table, w1p, b1p, w2p, b2p)

    return out[:B, :H]


# ----------------------------------------------------------------------------
# Module setup (sinusoidal table + synthetic parameters)
# ----------------------------------------------------------------------------
def get_diff_step_embedding(emb_dim, max_steps):
    # Matches the PyTorch spec: steps * 10 ** (dims * 4 / emb_dim), [sin, cos].
    steps = jnp.arange(max_steps, dtype=jnp.float32)[:, None]         # (S, 1)
    dims = jnp.arange(emb_dim, dtype=jnp.float32)[None, :]            # (1, E)
    table = steps * (10.0 ** (dims * 4.0 / emb_dim))                  # (S, E)
    return jnp.concatenate([jnp.sin(table), jnp.cos(table)], axis=1)  # (S, 2E)


def init_params(key, emb_dim, h_dim):
    """Deterministic synthetic params; weights stored as (in, out)."""
    k1, k2, k3, k4 = jax.random.split(key, 4)
    in1 = 2 * emb_dim
    lim1 = 1.0 / jnp.sqrt(in1)
    lim2 = 1.0 / jnp.sqrt(h_dim)
    w1 = jax.random.uniform(k1, (in1, h_dim), jnp.float32, -lim1, lim1)
    b1 = jax.random.uniform(k2, (h_dim,), jnp.float32, -lim1, lim1)
    w2 = jax.random.uniform(k3, (h_dim, h_dim), jnp.float32, -lim2, lim2)
    b2 = jax.random.uniform(k4, (h_dim,), jnp.float32, -lim2, lim2)
    return w1, b1, w2, b2


# ----------------------------------------------------------------------------
if __name__ == "__main__":
    emb_dim = 8          # -> feature dim 2*emb_dim = 16
    h_dim = 32
    max_steps = 500
    batch = 4

    key = jax.random.PRNGKey(0)
    kp, ks = jax.random.split(key)
    params = init_params(kp, emb_dim, h_dim)
    table = get_diff_step_embedding(emb_dim, max_steps)
    diffusion_step = jax.random.randint(ks, (batch,), 0, max_steps)

    fwd = jax.jit(diffusion_embedding_forward)
    out = fwd(diffusion_step, table, params)
    out = jax.block_until_ready(out)

    # Pure-JAX reference of the full forward (gather + MLP).
    x = table[diffusion_step]
    w1, b1, w2, b2 = params
    h = x @ w1 + b1
    h = h * jax.nn.sigmoid(h)
    y = h @ w2 + b2
    ref = y * jax.nn.sigmoid(y)

    assert out.shape == (batch, h_dim)
    assert jnp.allclose(out, ref, atol=1e-5, rtol=1e-5)

    print("KERNEL_OK")
</pallas_src>

<mosaic_0001>
module attributes {stable_mosaic.version = 11 : i64} {
  func.func @_diff_embed_kernel(%arg0: i32, %arg1: memref<8xi32, #tpu.memory_space<smem>>, %arg2: memref<500x16xf32, #tpu.memory_space<vmem>>, %arg3: memref<16x128xf32, #tpu.memory_space<vmem>>, %arg4: memref<1x128xf32, #tpu.memory_space<vmem>>, %arg5: memref<128x128xf32, #tpu.memory_space<vmem>>, %arg6: memref<1x128xf32, #tpu.memory_space<vmem>>, %arg7: memref<8x128xf32, #tpu.memory_space<vmem>>, %arg8: memref<8x16xf32, #tpu.memory_space<vmem>>) attributes {dimension_semantics = [#tpu.dimension_semantics<parallel>], iteration_bounds = array<i64: 1>, scalar_prefetch = 1 : i64, scratch_operands = 1 : i64, tpu.core_type = #tpu.core_type<tc>, window_params = [{pipeline_mode = #tpu.pipeline_mode<synchronous>, transform_indices = @transform_0, window_bounds = array<i64: 500, 16>}, {pipeline_mode = #tpu.pipeline_mode<synchronous>, transform_indices = @transform_1, window_bounds = array<i64: 16, 128>}, {pipeline_mode = #tpu.pipeline_mode<synchronous>, transform_indices = @transform_2, window_bounds = array<i64: 1, 128>}, {pipeline_mode = #tpu.pipeline_mode<synchronous>, transform_indices = @transform_3, window_bounds = array<i64: 128, 128>}, {pipeline_mode = #tpu.pipeline_mode<synchronous>, transform_indices = @transform_4, window_bounds = array<i64: 1, 128>}, {transform_indices = @transform_5, window_bounds = array<i64: 8, 128>}]} {
    %c8_i32 = arith.constant 8 : i32
    %0 = arith.muli %arg0, %c8_i32 : i32
    %c0_i32 = arith.constant 0 : i32
    %1 = arith.addi %0, %c0_i32 : i32
    %2 = arith.index_cast %1 : i32 to index
    %3 = memref.load %arg1[%2] : memref<8xi32, #tpu.memory_space<smem>>
    %4 = arith.index_cast %3 : i32 to index
    %c0 = arith.constant 0 : index
    %5 = vector.load %arg2[%4, %c0] : memref<500x16xf32, #tpu.memory_space<vmem>>, vector<1x16xf32>
    %c0_0 = arith.constant 0 : index
    %c0_1 = arith.constant 0 : index
    %6 = vector.load %arg8[%c0_0, %c0_1] : memref<8x16xf32, #tpu.memory_space<vmem>>, vector<1x16xf32>
    tpu.vector_store %arg8[%c0_0, %c0_1], %5 {strides = array<i32>} : memref<8x16xf32, #tpu.memory_space<vmem>>, vector<1x16xf32>,
    %c8_i32_2 = arith.constant 8 : i32
    %7 = arith.muli %arg0, %c8_i32_2 : i32
    %c1_i32 = arith.constant 1 : i32
    %8 = arith.addi %7, %c1_i32 : i32
    %9 = arith.index_cast %8 : i32 to index
    %10 = memref.load %arg1[%9] : memref<8xi32, #tpu.memory_space<smem>>
    %11 = arith.index_cast %10 : i32 to index
    %c0_3 = arith.constant 0 : index
    %12 = vector.load %arg2[%11, %c0_3] : memref<500x16xf32, #tpu.memory_space<vmem>>, vector<1x16xf32>
    %c1 = arith.constant 1 : index
    %c0_4 = arith.constant 0 : index
    %13 = vector.load %arg8[%c1, %c0_4] : memref<8x16xf32, #tpu.memory_space<vmem>>, vector<1x16xf32>
    tpu.vector_store %arg8[%c1, %c0_4], %12 {strides = array<i32>} : memref<8x16xf32, #tpu.memory_space<vmem>>, vector<1x16xf32>,
    %c8_i32_5 = arith.constant 8 : i32
    %14 = arith.muli %arg0, %c8_i32_5 : i32
    %c2_i32 = arith.constant 2 : i32
    %15 = arith.addi %14, %c2_i32 : i32
    %16 = arith.index_cast %15 : i32 to index
    %17 = memref.load %arg1[%16] : memref<8xi32, #tpu.memory_space<smem>>
    %18 = arith.index_cast %17 : i32 to index
    %c0_6 = arith.constant 0 : index
    %19 = vector.load %arg2[%18, %c0_6] : memref<500x16xf32, #tpu.memory_space<vmem>>, vector<1x16xf32>
    %c2 = arith.constant 2 : index
    %c0_7 = arith.constant 0 : index
    %20 = vector.load %arg8[%c2, %c0_7] : memref<8x16xf32, #tpu.memory_space<vmem>>, vector<1x16xf32>
    tpu.vector_store %arg8[%c2, %c0_7], %19 {strides = array<i32>} : memref<8x16xf32, #tpu.memory_space<vmem>>, vector<1x16xf32>,
    %c8_i32_8 = arith.constant 8 : i32
    %21 = arith.muli %arg0, %c8_i32_8 : i32
    %c3_i32 = arith.constant 3 : i32
    %22 = arith.addi %21, %c3_i32 : i32
    %23 = arith.index_cast %22 : i32 to index
    %24 = memref.load %arg1[%23] : memref<8xi32, #tpu.memory_space<smem>>
    %25 = arith.index_cast %24 : i32 to index
    %c0_9 = arith.constant 0 : index
    %26 = vector.load %arg2[%25, %c0_9] : memref<500x16xf32, #tpu.memory_space<vmem>>, vector<1x16xf32>
    %c3 = arith.constant 3 : index
    %c0_10 = arith.constant 0 : index
    %27 = vector.load %arg8[%c3, %c0_10] : memref<8x16xf32, #tpu.memory_space<vmem>>, vector<1x16xf32>
    tpu.vector_store %arg8[%c3, %c0_10], %26 {strides = array<i32>} : memref<8x16xf32, #tpu.memory_space<vmem>>, vector<1x16xf32>,
    %c8_i32_11 = arith.constant 8 : i32
    %28 = arith.muli %arg0, %c8_i32_11 : i32
    %c4_i32 = arith.constant 4 : i32
    %29 = arith.addi %28, %c4_i32 : i32
    %30 = arith.index_cast %29 : i32 to index
    %31 = memref.load %arg1[%30] : memref<8xi32, #tpu.memory_space<smem>>
    %32 = arith.index_cast %31 : i32 to index
    %c0_12 = arith.constant 0 : index
    %33 = vector.load %arg2[%32, %c0_12] : memref<500x16xf32, #tpu.memory_space<vmem>>, vector<1x16xf32>
    %c4 = arith.constant 4 : index
    %c0_13 = arith.constant 0 : index
    %34 = vector.load %arg8[%c4, %c0_13] : memref<8x16xf32, #tpu.memory_space<vmem>>, vector<1x16xf32>
    tpu.vector_store %arg8[%c4, %c0_13], %33 {strides = array<i32>} : memref<8x16xf32, #tpu.memory_space<vmem>>, vector<1x16xf32>,
    %c8_i32_14 = arith.constant 8 : i32
    %35 = arith.muli %arg0, %c8_i32_14 : i32
    %c5_i32 = arith.constant 5 : i32
    %36 = arith.addi %35, %c5_i32 : i32
    %37 = arith.index_cast %36 : i32 to index
    %38 = memref.load %arg1[%37] : memref<8xi32, #tpu.memory_space<smem>>
    %39 = arith.index_cast %38 : i32 to index
    %c0_15 = arith.constant 0 : index
    %40 = vector.load %arg2[%39, %c0_15] : memref<500x16xf32, #tpu.memory_space<vmem>>, vector<1x16xf32>
    %c5 = arith.constant 5 : index
    %c0_16 = arith.constant 0 : index
    %41 = vector.load %arg8[%c5, %c0_16] : memref<8x16xf32, #tpu.memory_space<vmem>>, vector<1x16xf32>
    tpu.vector_store %arg8[%c5, %c0_16], %40 {strides = array<i32>} : memref<8x16xf32, #tpu.memory_space<vmem>>, vector<1x16xf32>,
    %c8_i32_17 = arith.constant 8 : i32
    %42 = arith.muli %arg0, %c8_i32_17 : i32
    %c6_i32 = arith.constant 6 : i32
    %43 = arith.addi %42, %c6_i32 : i32
    %44 = arith.index_cast %43 : i32 to index
    %45 = memref.load %arg1[%44] : memref<8xi32, #tpu.memory_space<smem>>
    %46 = arith.index_cast %45 : i32 to index
    %c0_18 = arith.constant 0 : index
    %47 = vector.load %arg2[%46, %c0_18] : memref<500x16xf32, #tpu.memory_space<vmem>>, vector<1x16xf32>
    %c6 = arith.constant 6 : index
    %c0_19 = arith.constant 0 : index
    %48 = vector.load %arg8[%c6, %c0_19] : memref<8x16xf32, #tpu.memory_space<vmem>>, vector<1x16xf32>
    tpu.vector_store %arg8[%c6, %c0_19], %47 {strides = array<i32>} : memref<8x16xf32, #tpu.memory_space<vmem>>, vector<1x16xf32>,
    %c8_i32_20 = arith.constant 8 : i32
    %49 = arith.muli %arg0, %c8_i32_20 : i32
    %c7_i32 = arith.constant 7 : i32
    %50 = arith.addi %49, %c7_i32 : i32
    %51 = arith.index_cast %50 : i32 to index
    %52 = memref.load %arg1[%51] : memref<8xi32, #tpu.memory_space<smem>>
    %53 = arith.index_cast %52 : i32 to index
    %c0_21 = arith.constant 0 : index
    %54 = vector.load %arg2[%53, %c0_21] : memref<500x16xf32, #tpu.memory_space<vmem>>, vector<1x16xf32>
    %c7 = arith.constant 7 : index
    %c0_22 = arith.constant 0 : index
    %55 = vector.load %arg8[%c7, %c0_22] : memref<8x16xf32, #tpu.memory_space<vmem>>, vector<1x16xf32>
    tpu.vector_store %arg8[%c7, %c0_22], %54 {strides = array<i32>} : memref<8x16xf32, #tpu.memory_space<vmem>>, vector<1x16xf32>,
    %c0_23 = arith.constant 0 : index
    %c0_24 = arith.constant 0 : index
    %56 = vector.load %arg8[%c0_23, %c0_24] : memref<8x16xf32, #tpu.memory_space<vmem>>, vector<8x16xf32>
    %c0_25 = arith.constant 0 : index
    %c0_26 = arith.constant 0 : index
    %57 = vector.load %arg3[%c0_25, %c0_26] : memref<16x128xf32, #tpu.memory_space<vmem>>, vector<16x128xf32>
    %cst = arith.constant dense<0.000000e+00> : vector<8x128xf32>
    %58 = tpu.matmul %56, %57, %cst {dimension_numbers = #tpu.dot_dimension_numbers<[1], [0], [0], [1], [0, 0, 1, 1], [], []>} : vector<8x16xf32>, vector<16x128xf32>, vector<8x128xf32> -> vector<8x128xf32>
    %c0_27 = arith.constant 0 : index
    %c0_28 = arith.constant 0 : index
    %59 = vector.load %arg4[%c0_27, %c0_28] : memref<1x128xf32, #tpu.memory_space<vmem>>, vector<1x128xf32>
    %60 = vector.broadcast %59 : vector<1x128xf32> to vector<8x128xf32>
    %61 = arith.addf %58, %60 : vector<8x128xf32>
    %62 = arith.negf %61 : vector<8x128xf32>
    %63 = math.exp %62 : vector<8x128xf32>
    %cst_29 = arith.constant 1.000000e+00 : f32
    %64 = vector.broadcast %cst_29 : f32 to vector<8x128xf32>
    %65 = arith.addf %64, %63 : vector<8x128xf32>
    %66 = arith.divf %64, %65 : vector<8x128xf32>
    %67 = arith.mulf %61, %66 : vector<8x128xf32>
    %c0_30 = arith.constant 0 : index
    %c0_31 = arith.constant 0 : index
    %68 = vector.load %arg5[%c0_30, %c0_31] : memref<128x128xf32, #tpu.memory_space<vmem>>, vector<128x128xf32>
    %cst_32 = arith.constant dense<0.000000e+00> : vector<8x128xf32>
    %69 = tpu.matmul %67, %68, %cst_32 {dimension_numbers = #tpu.dot_dimension_numbers<[1], [0], [0], [1], [0, 0, 1, 1], [], []>} : vector<8x128xf32>, vector<128x128xf32>, vector<8x128xf32> -> vector<8x128xf32>
    %c0_33 = arith.constant 0 : index
    %c0_34 = arith.constant 0 : index
    %70 = vector.load %arg6[%c0_33, %c0_34] : memref<1x128xf32, #tpu.memory_space<vmem>>, vector<1x128xf32>
    %71 = vector.broadcast %70 : vector<1x128xf32> to vector<8x128xf32>
    %72 = arith.addf %69, %71 : vector<8x128xf32>
    %73 = arith.negf %72 : vector<8x128xf32>
    %74 = math.exp %73 : vector<8x128xf32>
    %cst_35 = arith.constant 1.000000e+00 : f32
    %75 = vector.broadcast %cst_35 : f32 to vector<8x128xf32>
    %76 = arith.addf %75, %74 : vector<8x128xf32>
    %77 = arith.divf %75, %76 : vector<8x128xf32>
    %78 = arith.mulf %72, %77 : vector<8x128xf32>
    %c0_36 = arith.constant 0 : index
    %c0_37 = arith.constant 0 : index
    %79 = vector.load %arg7[%c0_36, %c0_37] : memref<8x128xf32, #tpu.memory_space<vmem>>, vector<8x128xf32>
    tpu.vector_store %arg7[%c0_36, %c0_37], %78 {strides = array<i32>} : memref<8x128xf32, #tpu.memory_space<vmem>>, vector<8x128xf32>,
    return
  }
  func.func @transform_0(%arg0: i32, %arg1: memref<8xi32, #tpu.memory_space<smem>>) -> (i32, i32) {
    %c0_i32 = arith.constant 0 : i32
    %c0_i32_0 = arith.constant 0 : i32
    %c0_i32_1 = arith.constant 0 : i32
    return %c0_i32, %c0_i32_0 : i32, i32
  }
  func.func @transform_1(%arg0: i32, %arg1: memref<8xi32, #tpu.memory_space<smem>>) -> (i32, i32) {
    %c0_i32 = arith.constant 0 : i32
    %c0_i32_0 = arith.constant 0 : i32
    %c0_i32_1 = arith.constant 0 : i32
    return %c0_i32, %c0_i32_0 : i32, i32
  }
  func.func @transform_2(%arg0: i32, %arg1: memref<8xi32, #tpu.memory_space<smem>>) -> (i32, i32) {
    %c0_i32 = arith.constant 0 : i32
    %c0_i32_0 = arith.constant 0 : i32
    %c0_i32_1 = arith.constant 0 : i32
    return %c0_i32, %c0_i32_0 : i32, i32
  }
  func.func @transform_3(%arg0: i32, %arg1: memref<8xi32, #tpu.memory_space<smem>>) -> (i32, i32) {
    %c0_i32 = arith.constant 0 : i32
    %c0_i32_0 = arith.constant 0 : i32
    %c0_i32_1 = arith.constant 0 : i32
    return %c0_i32, %c0_i32_0 : i32, i32
  }
  func.func @transform_4(%arg0: i32, %arg1: memref<8xi32, #tpu.memory_space<smem>>) -> (i32, i32) {
    %c0_i32 = arith.constant 0 : i32
    %c0_i32_0 = arith.constant 0 : i32
    %c0_i32_1 = arith.constant 0 : i32
    return %c0_i32, %c0_i32_0 : i32, i32
  }
  func.func @transform_5(%arg0: i32, %arg1: memref<8xi32, #tpu.memory_space<smem>>) -> (i32, i32) {
    %c0_i32 = arith.constant 0 : i32
    %c0_i32_0 = arith.constant 0 : i32
    return %arg0, %c0_i32 : i32, i32
  }
}

</mosaic_0001>

<llo_original>
// kernel: diffusion_embedding_forward.1
$region0: #{diffusion_embedding_forward.1}
  #allocation0 [shape = 'u32[]', space=smem, size = 0x4, offset = 0x4, fixed_abs, tag = 'smem constant byte address 0x4 - core index']
  #allocation1 [shape = 'u32[144,128]{1,0:T(1,128)}', space=vmem, size = 0x12000, scoped, tag = 'internal scratch']
  #allocation2 [shape = 'f32[8,16]{1,0:T(8,128)}', space=vmem, size = 0x1000, scoped, tag = 'scratch operand']
  #allocation3 [shape = 's32[1]{0}', space=sflag, size = 0x4, scoped, tag = 'scoped memory for diffusion_embedding_forward.1']
  #allocation4 [shape = 'u8[512]{0}', space=smem, size = 0x200, scoped, tag = 'prefetched SMEM operand 0']
  %s0 = inlined_call_operand.vmem [shape: s32[8], index: 0, kind: input, shape index: {}]
  %s1 = inlined_call_operand.vmem [shape: f32[500,16], index: 1, kind: input, shape index: {}]
  %s2 = inlined_call_operand.vmem [shape: f32[16,128], index: 2, kind: input, shape index: {}]
  %s3 = inlined_call_operand.vmem [shape: f32[1,128], index: 3, kind: input, shape index: {}]
  %s4 = inlined_call_operand.vmem [shape: f32[128,128], index: 4, kind: input, shape index: {}]
  %s5 = inlined_call_operand.vmem [shape: f32[1,128], index: 5, kind: input, shape index: {}]
  %s6 = inlined_call_operand.vmem [shape: f32[8,128], index: 6, kind: output, shape index: {}]
  %s7 = sld [smem:[#allocation0]]
  $region30: #{diffusion_embedding_forward.1} parent=0
    _
  %s9 = ssub.s32 1, %s7
  %s10 = scalar_select 0, %s9, %s7
  %s11 = sshll.u32 %s0, 4
  %s12 = int_to_ptr.vmem [resolvable:$true] %s11
  %14 = dma.vmem_to_smem %s12, 16, [#allocation4], [#allocation3]
  %15 = dma.done [#allocation3], 16
  %16 = sfence
  // Predicated region
  $region2: #{diffusion_embedding_forward.1} parent=0 // pred_check
    _
  $region3: #{diffusion_embedding_forward.1} parent=0 // pred_check_branch
    %18 = sbr.rel (0) target = $region5
  $region4: #{diffusion_embedding_forward.1} parent=0 // pred_region
    _
  $region5: #{diffusion_embedding_forward.1} parent=0 // pred_fallthru
    _
  // Predicated region
  $region6: #{diffusion_embedding_forward.1} parent=0 // pred_check
    _
  $region7: #{diffusion_embedding_forward.1} parent=0 // pred_check_branch
    %20 = sbr.rel (0) target = $region9
  $region8: #{diffusion_embedding_forward.1} parent=0 // pred_region
    _
  $region9: #{diffusion_embedding_forward.1} parent=0 // pred_fallthru
    _
  // Predicated region
  $region10: #{diffusion_embedding_forward.1} parent=0 // pred_check
    _
  $region11: #{diffusion_embedding_forward.1} parent=0 // pred_check_branch
    %22 = sbr.rel (0) target = $region13
  $region12: #{diffusion_embedding_forward.1} parent=0 // pred_region
    _
  $region13: #{diffusion_embedding_forward.1} parent=0 // pred_fallthru
    _
  // Predicated region
  $region14: #{diffusion_embedding_forward.1} parent=0 // pred_check
    _
  $region15: #{diffusion_embedding_forward.1} parent=0 // pred_check_branch
    %24 = sbr.rel (0) target = $region17
  $region16: #{diffusion_embedding_forward.1} parent=0 // pred_region
    _
  $region17: #{diffusion_embedding_forward.1} parent=0 // pred_fallthru
    _
  // Predicated region
  $region18: #{diffusion_embedding_forward.1} parent=0 // pred_check
    _
  $region19: #{diffusion_embedding_forward.1} parent=0 // pred_check_branch
    %26 = sbr.rel (0) target = $region21
  $region20: #{diffusion_embedding_forward.1} parent=0 // pred_region
    _
  $region21: #{diffusion_embedding_forward.1} parent=0 // pred_fallthru
    _
  %s27 = smul.u32 0, 8
  %s28 = sld [smem:[#allocation4 + %s27]]
  %s29 = scalar_lea.vmem %s1, %s28
  %v30 = vld [vmem:[%s29] sm:$0x1]
  %vm31 = vcmask 122880
  %32 = vst.msk [vmem:[#allocation2] sm:$0x1] %vm31, %v30
  %s33 = sadd.s32 %s27, 1
  %s34 = sld [smem:[#allocation4 + %s33]]
  %s35 = scalar_lea.vmem %s1, %s34
  %v36 = vld [vmem:[%s35] sm:$0x1]
  %37 = vst.msk [vmem:[#allocation2 + $0x1] sm:$0x1] %vm31, %v36
  %s38 = sadd.s32 %s27, 2
  %s39 = sld [smem:[#allocation4 + %s38]]
  %s40 = scalar_lea.vmem %s1, %s39
  %v41 = vld [vmem:[%s40] sm:$0x1]
  %42 = vst.msk [vmem:[#allocation2 + $0x2] sm:$0x1] %vm31, %v41
  %s43 = sadd.s32 %s27, 3
  %s44 = sld [smem:[#allocation4 + %s43]]
  %s45 = scalar_lea.vmem %s1, %s44
  %v46 = vld [vmem:[%s45] sm:$0x1]
  %47 = vst.msk [vmem:[#allocation2 + $0x3] sm:$0x1] %vm31, %v46
  %s48 = sadd.s32 %s27, 4
  %s49 = sld [smem:[#allocation4 + %s48]]
  %s50 = scalar_lea.vmem %s1, %s49
  %v51 = vld [vmem:[%s50] sm:$0x1]
  %52 = vst.msk [vmem:[#allocation2 + $0x4] sm:$0x1] %vm31, %v51
  %s53 = sadd.s32 %s27, 5
  %s54 = sld [smem:[#allocation4 + %s53]]
  %s55 = scalar_lea.vmem %s1, %s54
  %v56 = vld [vmem:[%s55] sm:$0x1]
  %57 = vst.msk [vmem:[#allocation2 + $0x5] sm:$0x1] %vm31, %v56
  %s58 = sadd.s32 %s27, 6
  %s59 = sld [smem:[#allocation4 + %s58]]
  %s60 = scalar_lea.vmem %s1, %s59
  %v61 = vld [vmem:[%s60] sm:$0x1]
  %62 = vst.msk [vmem:[#allocation2 + $0x6] sm:$0x1] %vm31, %v61
  %s63 = sadd.s32 %s27, 7
  %s64 = sld [smem:[#allocation4 + %s63]]
  %s65 = scalar_lea.vmem %s1, %s64
  %v66 = vld [vmem:[%s65] sm:$0x1]
  %67 = vst.msk [vmem:[#allocation2 + $0x7] sm:$0x1] %vm31, %v66
  %v68 = vld [vmem:[#allocation2] sm:$0xff]
  %v69 = vld [vmem:[%s2] sm:$0xff]
  %v70 = vld [vmem:[%s2 + $0x8] sm:$0xff]
  %v71 = vld [vmem:[%s3] sm:$0x1]
  %v73 = vlaneseq
  %v74 = vshrl.u32 %v73, 7
  %v75 = vsub.s32 0, %v74
  %v76 = vrot.slane %v71, %v75
  %vm78 = vcmask 130048
  %v80 = vsel %vm78, %v68, 0
  %82 = vmatprep.subr.mxu0 0.0
  %83 = vmatpush1.msra.mxu0 %v69
  %84 = vmatprep.subr.mxu0 0.0
  %85 = vmatpush1.msra.mxu0 %v70
  %86 = vmatprep.subr.mxu0 0.0
  %87 = vmatpush1.msra.mxu0 0.0
  %88 = vmatprep.subr.mxu0 0.0
  %89 = vmatpush1.msra.mxu0 0.0
  %90 = vmatprep.subr.mxu0 0.0
  %91 = vmatpush1.msra.mxu0 0.0
  %92 = vmatprep.subr.mxu0 0.0
  %93 = vmatpush1.msra.mxu0 0.0
  %94 = vmatprep.subr.mxu0 0.0
  %95 = vmatpush1.msra.mxu0 0.0
  %96 = vmatprep.subr.mxu0 0.0
  %97 = vmatpush1.msra.mxu0 0.0
  %98 = vmatprep.subr.mxu0 0.0
  %99 = vmatpush1.msra.mxu0 0.0
  %100 = vmatprep.subr.mxu0 0.0
  %101 = vmatpush1.msra.mxu0 0.0
  %102 = vmatprep.subr.mxu0 0.0
  %103 = vmatpush1.msra.mxu0 0.0
  %104 = vmatprep.subr.mxu0 0.0
  %105 = vmatpush1.msra.mxu0 0.0
  %106 = vmatprep.subr.mxu0 0.0
  %107 = vmatpush1.msra.mxu0 0.0
  %108 = vmatprep.subr.mxu0 0.0
  %109 = vmatpush1.msra.mxu0 0.0
  %110 = vmatprep.subr.mxu0 0.0
  %111 = vmatpush1.msra.mxu0 0.0
  %112 = vmatprep.subr.mxu0 0.0
  %113 = vmatpush1.msra.mxu0 0.0
  %114 = vmatprep.subr.mxu0 0.0
  %115 = vmatpush1.msra.mxu0 0.0
  %116 = vmatprep.subr.mxu0 0.0
  %117 = vmatpush1.msra.mxu0 0.0
  %118 = vmatprep.subr.mxu0 0.0
  %119 = vmatpush1.msra.mxu0 0.0
  %120 = vmatprep.subr.mxu0 0.0
  %121 = vmatpush1.msra.mxu0 0.0
  %122 = vmatprep.subr.mxu0 0.0
  %123 = vmatpush1.msra.mxu0 0.0
  %124 = vmatprep.subr.mxu0 0.0
  %125 = vmatpush1.msra.mxu0 0.0
  %126 = vmatprep.subr.mxu0 0.0
  %127 = vmatpush1.msra.mxu0 0.0
  %128 = vmatprep.subr.mxu0 0.0
  %129 = vmatpush1.msra.mxu0 0.0
  %130 = vmatprep.subr.mxu0 0.0
  %131 = vmatpush1.msra.mxu0 0.0
  %132 = vmatprep.subr.mxu0 0.0
  %133 = vmatpush1.msra.mxu0 0.0
  %134 = vmatprep.subr.mxu0 0.0
  %135 = vmatpush1.msra.mxu0 0.0
  %136 = vmatprep.subr.mxu0 0.0
  %137 = vmatpush1.msra.mxu0 0.0
  %138 = vmatprep.subr.mxu0 0.0
  %139 = vmatpush1.msra.mxu0 0.0
  %140 = vmatprep.subr.mxu0 0.0
  %141 = vmatpush1.msra.mxu0 0.0
  %142 = vmatprep.subr.mxu0 0.0
  %143 = vmatpush1.msra.mxu0 0.0
  %144 = vmatprep.subr.mxu0 0.0
  %145 = vmatpush1.msra.mxu0 0.0
  %146 = vmatprep.mubr.f32.mxu0 0.0
  %147 = vmatmul.mubr.f32.gmra.mrb[0].mxu0 %v80
  %v148 = vpop.f32.mrb[0].mxu0
  %v149 = vadd.f32 %v76, %v148
  %v150 = vpop.f32.mrb[0].mxu0
  %151 = vdwg.mxu0
  %v152 = vxor.u32 %v149, 2147483648
  %v153 = vmul.f32 %v152, 1.442695
  %v154 = vpow.pop %v153
  %v155 = vadd.f32 %v154, 1.0
  %v156 = vrcp.pop %v155
  %v157 = vmul.f32 1.0, %v156
  %v158 = vmul.f32 %v149, %v157
  %v159 = vld [vmem:[%s4] sm:$0xff]
  %v160 = vld [vmem:[%s4 + $0x8] sm:$0xff]
  %v161 = vld [vmem:[%s4 + $0x10] sm:$0xff]
  %v162 = vld [vmem:[%s4 + $0x18] sm:$0xff]
  %v163 = vld [vmem:[%s4 + $0x20] sm:$0xff]
  %v164 = vld [vmem:[%s4 + $0x28] sm:$0xff]
  %v165 = vld [vmem:[%s4 + $0x30] sm:$0xff]
  %v166 = vld [vmem:[%s4 + $0x38] sm:$0xff]
  %v167 = vld [vmem:[%s4 + $0x40] sm:$0xff]
  %v168 = vld [vmem:[%s4 + $0x48] sm:$0xff]
  %v169 = vld [vmem:[%s4 + $0x50] sm:$0xff]
  %v170 = vld [vmem:[%s4 + $0x58] sm:$0xff]
  %v171 = vld [vmem:[%s4 + $0x60] sm:$0xff]
  %v172 = vld [vmem:[%s4 + $0x68] sm:$0xff]
  %v173 = vld [vmem:[%s4 + $0x70] sm:$0xff]
  %v174 = vld [vmem:[%s4 + $0x78] sm:$0xff]
  %v175 = vld [vmem:[%s5] sm:$0x1]
  %v177 = vlaneseq
  %v178 = vshrl.u32 %v177, 7
  %v179 = vsub.s32 0, %v178
  %v180 = vrot.slane %v175, %v179
  %182 = vmatprep.subr.mxu0 0.0
  %183 = vmatpush1.msra.mxu0 %v159
  %184 = vmatprep.subr.mxu0 0.0
  %185 = vmatpush1.msra.mxu0 %v160
  %186 = vmatprep.subr.mxu0 0.0
  %187 = vmatpush1.msra.mxu0 %v161
  %188 = vmatprep.subr.mxu0 0.0
  %189 = vmatpush1.msra.mxu0 %v162
  %190 = vmatprep.subr.mxu0 0.0
  %191 = vmatpush1.msra.mxu0 %v163
  %192 = vmatprep.subr.mxu0 0.0
  %193 = vmatpush1.msra.mxu0 %v164
  %194 = vmatprep.subr.mxu0 0.0
  %195 = vmatpush1.msra.mxu0 %v165
  %196 = vmatprep.subr.mxu0 0.0
  %197 = vmatpush1.msra.mxu0 %v166
  %198 = vmatprep.subr.mxu0 0.0
  %199 = vmatpush1.msra.mxu0 %v167
  %200 = vmatprep.subr.mxu0 0.0
  %201 = vmatpush1.msra.mxu0 %v168
  %202 = vmatprep.subr.mxu0 0.0
  %203 = vmatpush1.msra.mxu0 %v169
  %204 = vmatprep.subr.mxu0 0.0
  %205 = vmatpush1.msra.mxu0 %v170
  %206 = vmatprep.subr.mxu0 0.0
  %207 = vmatpush1.msra.mxu0 %v171
  %208 = vmatprep.subr.mxu0 0.0
  %209 = vmatpush1.msra.mxu0 %v172
  %210 = vmatprep.subr.mxu0 0.0
  %211 = vmatpush1.msra.mxu0 %v173
  %212 = vmatprep.subr.mxu0 0.0
  %213 = vmatpush1.msra.mxu0 %v174
  %214 = vmatprep.subr.mxu0 0.0
  %215 = vmatpush1.msra.mxu0 0.0
  %216 = vmatprep.subr.mxu0 0.0
  %217 = vmatpush1.msra.mxu0 0.0
  %218 = vmatprep.subr.mxu0 0.0
  %219 = vmatpush1.msra.mxu0 0.0
  %220 = vmatprep.subr.mxu0 0.0
  %221 = vmatpush1.msra.mxu0 0.0
  %222 = vmatprep.subr.mxu0 0.0
  %223 = vmatpush1.msra.mxu0 0.0
  %224 = vmatprep.subr.mxu0 0.0
  %225 = vmatpush1.msra.mxu0 0.0
  %226 = vmatprep.subr.mxu0 0.0
  %227 = vmatpush1.msra.mxu0 0.0
  %228 = vmatprep.subr.mxu0 0.0
  %229 = vmatpush1.msra.mxu0 0.0
  %230 = vmatprep.subr.mxu0 0.0
  %231 = vmatpush1.msra.mxu0 0.0
  %232 = vmatprep.subr.mxu0 0.0
  %233 = vmatpush1.msra.mxu0 0.0
  %234 = vmatprep.subr.mxu0 0.0
  %235 = vmatpush1.msra.mxu0 0.0
  %236 = vmatprep.subr.mxu0 0.0
  %237 = vmatpush1.msra.mxu0 0.0
  %238 = vmatprep.subr.mxu0 0.0
  %239 = vmatpush1.msra.mxu0 0.0
  %240 = vmatprep.subr.mxu0 0.0
  %241 = vmatpush1.msra.mxu0 0.0
  %242 = vmatprep.subr.mxu0 0.0
  %243 = vmatpush1.msra.mxu0 0.0
  %244 = vmatprep.subr.mxu0 0.0
  %245 = vmatpush1.msra.mxu0 0.0
  %246 = vmatprep.mubr.f32.mxu0 0.0
  %247 = vmatmul.mubr.f32.gmra.mrb[0].mxu0 %v158
  %v248 = vpop.f32.mrb[0].mxu0
  %v249 = vadd.f32 %v180, %v248
  %v250 = vpop.f32.mrb[0].mxu0
  %251 = vdwg.mxu0
  %v252 = vxor.u32 %v249, 2147483648
  %v253 = vmul.f32 %v252, 1.442695
  %v254 = vpow.pop %v253
  %v255 = vadd.f32 %v254, 1.0
  %v256 = vrcp.pop %v255
  %v257 = vmul.f32 1.0, %v256
  %v258 = vmul.f32 %v249, %v257
  %259 = vst [vmem:[%s6] sm:$0xff] %v258
  // Predicated region
  $region22: #{diffusion_embedding_forward.1} parent=0 // pred_check
    _
  $region23: #{diffusion_embedding_forward.1} parent=0 // pred_check_branch
    %261 = sbr.rel (0) target = $region25
  $region24: #{diffusion_embedding_forward.1} parent=0 // pred_region
    _
  $region25: #{diffusion_embedding_forward.1} parent=0 // pred_fallthru
    _
  // Predicated region
  $region26: #{diffusion_embedding_forward.1} parent=0 // pred_check
    _
  $region27: #{diffusion_embedding_forward.1} parent=0 // pred_check_branch
    %263 = sbr.rel (0) target = $region29
  $region28: #{diffusion_embedding_forward.1} parent=0 // pred_region
    _
  $region29: #{diffusion_embedding_forward.1} parent=0 // pred_fallthru
    _

</llo_original>
